<compile_context>
chip_gen: v7x
topology: tpu7x:2x2x1
jax: 0.10.0
libtpu: 0.0.40
codegen_flags: <defaults>
</compile_context>

<pallas_src>
import numpy as np

import jax
import jax.numpy as jnp
from jax import lax
from jax.experimental import pallas as pl
from jax.experimental.pallas import tpu as pltpu

_EPS = 1e-8            # torch cosine_similarity default eps
_EPS2 = _EPS * _EPS

_NUM_SPLITS = 2                        # leading "parallel" axis (v7x megacore)
_MAX_TILE_ROWS = 1024                  # diminishing returns beyond this
_VMEM_TILE_BUDGET = 12 * 1024 * 1024   # bytes for pipelined blocks (headroom)
_VMEM_LIMIT_BYTES = 32 * 1024 * 1024   # safe on v5e (128M), v6e (128M), v7x (64M)


def _cdiv(a, b):
    return -(-a // b)


def _round_up(x, m):
    return _cdiv(x, m) * m


# --------------------------------------------------------------------------
# Pallas kernel: fused weighted sum over all layers of
#   (weight_l / rows_l) * (1 - cos_sim(A_row, B_row))^2
# --------------------------------------------------------------------------
def _cosine_loss_kernel(a_ref, b_ref, s_ref, o_ref, acc_ref):
    i = pl.program_id(1)

    @pl.when(i == 0)
    def _():
        acc_ref[...] = jnp.zeros_like(acc_ref)

    a = a_ref[...].astype(jnp.float32)           # (tile_rows, L_pad)
    b = b_ref[...].astype(jnp.float32)

    dot = jnp.sum(a * b, axis=-1, keepdims=True)      # (tile_rows, 1)
    na2 = jnp.sum(a * a, axis=-1, keepdims=True)
    nb2 = jnp.sum(b * b, axis=-1, keepdims=True)
    # torch semantics: dot / (max(||a||, eps) * max(||b||, eps)); rsqrt -> EUP.
    cos = dot * lax.rsqrt(jnp.maximum(na2, _EPS2)) * lax.rsqrt(jnp.maximum(nb2, _EPS2))
    sq = (1.0 - cos) ** 2

    # per-row scale = weight_layer / rows_layer (0 for padding rows)
    acc_ref[...] += sq * s_ref[...]

    @pl.when(i == pl.num_programs(1) - 1)
    def _():
        total = jnp.sum(acc_ref[...])
        r = lax.broadcasted_iota(jnp.int32, o_ref.shape, 0)
        c = lax.broadcasted_iota(jnp.int32, o_ref.shape, 1)
        o_ref[...] = jnp.where((r == 0) & (c == 0), total, 0.0)


def _flatten_like_torch(A):
    # GlobalPercLoss.cosine_loss: if dim > 3 -> view(N, C, -1); cosine over dim=-1.
    if A.ndim > 3:
        A = A.reshape(A.shape[0], A.shape[1], -1)
    return A.reshape(-1, A.shape[-1])


def fused_cosine_loss(X_acts, Y_acts, weights):
    """sum_l weights[l] * mean((1 - cos_sim(A_l, B_l, dim=-1))**2), one pallas_call."""
    # TODO(synk): training use needs a jax.custom_vjp for the backward pass
    # through this pallas_call; forward-only here.
    A_list = [_flatten_like_torch(a) for a in X_acts]
    B_list = [_flatten_like_torch(b) for b in Y_acts]

    dtype = jnp.result_type(*[a.dtype for a in A_list + B_list])
    itemsize = jnp.dtype(dtype).itemsize
    L_pad = _round_up(max(a.shape[-1] for a in A_list), 128)

    # VMEM budget: 2 inputs x 2 pipeline buffers x (tile_rows, L_pad) plus the
    # lane-padded scale blocks and the (tile_rows, 1) accumulator scratch.
    bytes_per_row = 2 * 2 * L_pad * itemsize + 2 * 128 * 4 + 128 * 4
    tile_rows = max(8, min(_MAX_TILE_ROWS,
                           (_VMEM_TILE_BUDGET // bytes_per_row) // 8 * 8))

    R_total = sum(a.shape[0] for a in A_list)
    rows_per_split = _round_up(_cdiv(R_total, _NUM_SPLITS), 8)
    tile_rows = min(tile_rows, rows_per_split)         # stays a multiple of 8
    nb = _cdiv(rows_per_split, tile_rows)              # blocks per core-split
    R_pad = _NUM_SPLITS * nb * tile_rows

    def lane_pad(x):
        w = L_pad - x.shape[-1]
        return x if w == 0 else jnp.pad(x, ((0, 0), (0, w)))

    A_parts = [lane_pad(a).astype(dtype) for a in A_list]
    B_parts = [lane_pad(b).astype(dtype) for b in B_list]
    scale_parts = [np.full((a.shape[0],), float(weights[l]) / a.shape[0], np.float32)
                   for l, a in enumerate(A_list)]
    if R_pad > R_total:
        pad_rows = R_pad - R_total
        A_parts.append(jnp.zeros((pad_rows, L_pad), dtype))
        B_parts.append(jnp.zeros((pad_rows, L_pad), dtype))
        scale_parts.append(np.zeros((pad_rows,), np.float32))

    A_cat = jnp.concatenate(A_parts, axis=0)           # (R_pad, L_pad)
    B_cat = jnp.concatenate(B_parts, axis=0)
    scale = jnp.asarray(np.concatenate(scale_parts))[:, None]   # (R_pad, 1) f32

    out = pl.pallas_call(
        _cosine_loss_kernel,
        out_shape=jax.ShapeDtypeStruct((_NUM_SPLITS * 8, 128), jnp.float32),
        grid_spec=pltpu.PrefetchScalarGridSpec(
            num_scalar_prefetch=0,
            grid=(_NUM_SPLITS, nb),
            in_specs=[
                pl.BlockSpec((tile_rows, L_pad), lambda c, i: (c * nb + i, 0)),
                pl.BlockSpec((tile_rows, L_pad), lambda c, i: (c * nb + i, 0)),
                pl.BlockSpec((tile_rows, 1), lambda c, i: (c * nb + i, 0)),
            ],
            out_specs=pl.BlockSpec((8, 128), lambda c, i: (c, 0)),
            scratch_shapes=[pltpu.VMEM((tile_rows, 1), jnp.float32)],
        ),
        compiler_params=pltpu.CompilerParams(
            dimension_semantics=("parallel", "arbitrary"),
            vmem_limit_bytes=_VMEM_LIMIT_BYTES,
        ),
    )(A_cat, B_cat, scale)
    return jnp.sum(out)


# --------------------------------------------------------------------------
# Per-layer weights (GlobalPercLoss.__init__ weight schedule)
# --------------------------------------------------------------------------
def ease_in_curve(start_value, end_value, curve_strength, qtd_points):
    points = np.linspace(0.0, 1.0, qtd_points)
    eased = points ** curve_strength
    return start_value + (end_value - start_value) * eased


def ease_out_curve(start_value, end_value, curve_strength, qtd_points):
    points = np.linspace(0.0, 1.0, qtd_points)
    eased = 1.0 - (1.0 - points) ** curve_strength
    return start_value + (end_value - start_value) * eased


def make_weights(start_weight, end_weight, curve_force, count):
    if curve_force == 0:
        return np.linspace(start_weight, end_weight, count)
    elif start_weight <= end_weight:
        return ease_in_curve(start_weight, end_weight, curve_force, count)
    else:
        return ease_out_curve(start_weight, end_weight, curve_force, count)


# --------------------------------------------------------------------------
# Synthetic hooked backbone (stand-in for the external pretrained model).
# Every conv+ReLU output plays the role of one hooked activation.
# --------------------------------------------------------------------------
def init_backbone_params(key, in_ch, widths):
    params = []
    for w in widths:
        key, k = jax.random.split(key)
        W = jax.random.normal(k, (w, in_ch, 3, 3), jnp.float32) * 0.1  # OIHW
        b = jnp.zeros((w,), jnp.float32)
        params.append((W, b))
        in_ch = w
    return params


def backbone_forward(params, x):
    # x: NCHW
    acts = []
    for W, b in params:
        x = lax.conv_general_dilated(
            x, W, window_strides=(1, 1), padding="SAME",
            dimension_numbers=("NCHW", "OIHW", "NCHW"),
        )
        x = x + b[None, :, None, None]
        x = jax.nn.relu(x)
        acts.append(x)
    return acts


# --------------------------------------------------------------------------
# GlobalPercLoss forward
# --------------------------------------------------------------------------
def global_perc_loss(params, weights, X, Y):
    # TODO(synk): transform_normalization / get_nearest_supported_resolution
    # interpolation are model-config dependent and disabled here (normalize=None).
    Y = lax.stop_gradient(Y)                              # Y.detach()
    X_VAL = backbone_forward(params, X)
    Y_VAL = [lax.stop_gradient(a) for a in backbone_forward(params, Y)]  # no_grad
    return fused_cosine_loss(X_VAL, Y_VAL, weights)


if __name__ == "__main__":
    key = jax.random.PRNGKey(0)
    k_x, k_y, k_p = jax.random.split(key, 3)

    # Small shapes consistent with the module: batch=2, channels=4, spatial=16.
    X = jax.random.normal(k_x, (2, 4, 16, 16), jnp.float32)
    Y = jax.random.normal(k_y, (2, 4, 16, 16), jnp.float32)

    widths = (8, 8, 16)                       # 3 hooked layers
    params = init_backbone_params(k_p, in_ch=4, widths=widths)

    # config: start_weight=0.5, end_weight=1.5, curve_force=0 -> linspace
    weights = make_weights(0.5, 1.5, 0, len(widths))

    loss = global_perc_loss(params, weights, X, Y)
    loss = jax.block_until_ready(loss)
    assert jnp.isfinite(loss)
    print("KERNEL_OK")
</pallas_src>

<mosaic_0001>
module attributes {stable_mosaic.version = 11 : i64} {
  func.func @_cosine_loss_kernel(%arg0: i32, %arg1: i32, %arg2: memref<32x256xf32, #tpu.memory_space<vmem>>, %arg3: memref<32x256xf32, #tpu.memory_space<vmem>>, %arg4: memref<32x1xf32, #tpu.memory_space<vmem>>, %arg5: memref<8x128xf32, #tpu.memory_space<vmem>>, %arg6: memref<32x1xf32, #tpu.memory_space<vmem>>) attributes {dimension_semantics = [#tpu.dimension_semantics<parallel>, #tpu.dimension_semantics<arbitrary>], iteration_bounds = array<i64: 2, 1>, scalar_prefetch = 0 : i64, scratch_operands = 1 : i64, tpu.core_type = #tpu.core_type<tc>, window_params = [{transform_indices = @transform_0, window_bounds = array<i64: 32, 256>}, {transform_indices = @transform_1, window_bounds = array<i64: 32, 256>}, {transform_indices = @transform_2, window_bounds = array<i64: 32, 1>}, {transform_indices = @transform_3, window_bounds = array<i64: 8, 128>}]} {
    %c0_i32 = arith.constant 0 : i32
    %0 = arith.cmpi eq, %arg1, %c0_i32 : i32
    %1 = arith.extui %0 : i1 to i32
    %c0_i32_0 = arith.constant 0 : i32
    %2 = arith.cmpi ne, %1, %c0_i32_0 : i32
    scf.if %2 {
      %cst_17 = arith.constant 0.000000e+00 : f32
      %33 = vector.broadcast %cst_17 : f32 to vector<32x1xf32>
      %c0_18 = arith.constant 0 : index
      %c0_19 = arith.constant 0 : index
      %34 = vector.load %arg6[%c0_18, %c0_19] : memref<32x1xf32, #tpu.memory_space<vmem>>, vector<32x1xf32>
      tpu.vector_store %arg6[%c0_18, %c0_19], %33 {strides = array<i32>} : memref<32x1xf32, #tpu.memory_space<vmem>>, vector<32x1xf32>,
    } else {
    }
    %c0 = arith.constant 0 : index
    %c0_1 = arith.constant 0 : index
    %3 = vector.load %arg2[%c0, %c0_1] : memref<32x256xf32, #tpu.memory_space<vmem>>, vector<32x256xf32>
    %c0_2 = arith.constant 0 : index
    %c0_3 = arith.constant 0 : index
    %4 = vector.load %arg3[%c0_2, %c0_3] : memref<32x256xf32, #tpu.memory_space<vmem>>, vector<32x256xf32>
    %5 = arith.mulf %3, %4 : vector<32x256xf32>
    %cst = arith.constant dense<0.000000e+00> : vector<32xf32>
    %6 = vector.multi_reduction <add>, %5, %cst [1] : vector<32x256xf32> to vector<32xf32>
    %7 = vector.shape_cast %6 : vector<32xf32> to vector<32x1xf32>
    %8 = arith.mulf %3, %3 : vector<32x256xf32>
    %cst_4 = arith.constant dense<0.000000e+00> : vector<32xf32>
    %9 = vector.multi_reduction <add>, %8, %cst_4 [1] : vector<32x256xf32> to vector<32xf32>
    %10 = vector.shape_cast %9 : vector<32xf32> to vector<32x1xf32>
    %11 = arith.mulf %4, %4 : vector<32x256xf32>
    %cst_5 = arith.constant dense<0.000000e+00> : vector<32xf32>
    %12 = vector.multi_reduction <add>, %11, %cst_5 [1] : vector<32x256xf32> to vector<32xf32>
    %13 = vector.shape_cast %12 : vector<32xf32> to vector<32x1xf32>
    %cst_6 = arith.constant 1.000000e-16 : f32
    %14 = vector.broadcast %cst_6 : f32 to vector<32x1xf32>
    %15 = arith.maximumf %10, %14 : vector<32x1xf32>
    %16 = math.rsqrt %15 : vector<32x1xf32>
    %17 = arith.mulf %7, %16 : vector<32x1xf32>
    %cst_7 = arith.constant 1.000000e-16 : f32
    %18 = vector.broadcast %cst_7 : f32 to vector<32x1xf32>
    %19 = arith.maximumf %13, %18 : vector<32x1xf32>
    %20 = math.rsqrt %19 : vector<32x1xf32>
    %21 = arith.mulf %17, %20 : vector<32x1xf32>
    %cst_8 = arith.constant 1.000000e+00 : f32
    %22 = vector.broadcast %cst_8 : f32 to vector<32x1xf32>
    %23 = arith.subf %22, %21 : vector<32x1xf32>
    %24 = arith.mulf %23, %23 : vector<32x1xf32>
    %c0_9 = arith.constant 0 : index
    %c0_10 = arith.constant 0 : index
    %25 = vector.load %arg6[%c0_9, %c0_10] : memref<32x1xf32, #tpu.memory_space<vmem>>, vector<32x1xf32>
    %c0_11 = arith.constant 0 : index
    %c0_12 = arith.constant 0 : index
    %26 = vector.load %arg4[%c0_11, %c0_12] : memref<32x1xf32, #tpu.memory_space<vmem>>, vector<32x1xf32>
    %27 = arith.mulf %24, %26 : vector<32x1xf32>
    %28 = arith.addf %25, %27 : vector<32x1xf32>
    %c0_13 = arith.constant 0 : index
    %c0_14 = arith.constant 0 : index
    %29 = vector.load %arg6[%c0_13, %c0_14] : memref<32x1xf32, #tpu.memory_space<vmem>>, vector<32x1xf32>
    tpu.vector_store %arg6[%c0_13, %c0_14], %28 {strides = array<i32>} : memref<32x1xf32, #tpu.memory_space<vmem>>, vector<32x1xf32>,
    %c0_i32_15 = arith.constant 0 : i32
    %30 = arith.cmpi eq, %arg1, %c0_i32_15 : i32
    %31 = arith.extui %30 : i1 to i32
    %c0_i32_16 = arith.constant 0 : i32
    %32 = arith.cmpi ne, %31, %c0_i32_16 : i32
    scf.if %32 {
      %c0_17 = arith.constant 0 : index
      %c0_18 = arith.constant 0 : index
      %33 = vector.load %arg6[%c0_17, %c0_18] : memref<32x1xf32, #tpu.memory_space<vmem>>, vector<32x1xf32>
      %34 = vector.shape_cast %33 : vector<32x1xf32> to vector<1x32x1xf32>
      %cst_19 = arith.constant dense<0.000000e+00> : vector<1xf32>
      %35 = vector.multi_reduction <add>, %34, %cst_19 [1, 2] : vector<1x32x1xf32> to vector<1xf32>
      %36 = vector.shape_cast %35 : vector<1xf32> to vector<1x1x1xf32>
      %37 = vector.extract %36[0, 0, 0] : f32 from vector<1x1x1xf32>
      %38 = tpu.iota {dimensions = array<i32: 0>} : vector<8x128xi32>
      %39 = tpu.iota {dimensions = array<i32: 1>} : vector<8x128xi32>
      %c0_i32_20 = arith.constant 0 : i32
      %40 = vector.broadcast %c0_i32_20 : i32 to vector<8x128xi32>
      %41 = arith.cmpi eq, %38, %40 : vector<8x128xi32>
      %c0_i32_21 = arith.constant 0 : i32
      %42 = vector.broadcast %c0_i32_21 : i32 to vector<8x128xi32>
      %43 = arith.cmpi eq, %39, %42 : vector<8x128xi32>
      %44 = arith.andi %41, %43 : vector<8x128xi1>
      %cst_22 = arith.constant 0.000000e+00 : f32
      %45 = vector.broadcast %37 : f32 to vector<8x128xf32>
      %46 = vector.broadcast %cst_22 : f32 to vector<8x128xf32>
      %47 = arith.select %44, %45, %46 : vector<8x128xi1>, vector<8x128xf32>
      %c0_23 = arith.constant 0 : index
      %c0_24 = arith.constant 0 : index
      %48 = vector.load %arg5[%c0_23, %c0_24] : memref<8x128xf32, #tpu.memory_space<vmem>>, vector<8x128xf32>
      tpu.vector_store %arg5[%c0_23, %c0_24], %47 {strides = array<i32>} : memref<8x128xf32, #tpu.memory_space<vmem>>, vector<8x128xf32>,
    } else {
    }
    return
  }
  func.func @transform_0(%arg0: i32, %arg1: i32) -> (i32, i32) {
    %c1_i32 = arith.constant 1 : i32
    %0 = arith.muli %arg0, %c1_i32 : i32
    %1 = arith.addi %0, %arg1 : i32
    %c0_i32 = arith.constant 0 : i32
    %c0_i32_0 = arith.constant 0 : i32
    return %1, %c0_i32 : i32, i32
  }
  func.func @transform_1(%arg0: i32, %arg1: i32) -> (i32, i32) {
    %c1_i32 = arith.constant 1 : i32
    %0 = arith.muli %arg0, %c1_i32 : i32
    %1 = arith.addi %0, %arg1 : i32
    %c0_i32 = arith.constant 0 : i32
    %c0_i32_0 = arith.constant 0 : i32
    return %1, %c0_i32 : i32, i32
  }
  func.func @transform_2(%arg0: i32, %arg1: i32) -> (i32, i32) {
    %c1_i32 = arith.constant 1 : i32
    %0 = arith.muli %arg0, %c1_i32 : i32
    %1 = arith.addi %0, %arg1 : i32
    %c0_i32 = arith.constant 0 : i32
    %c0_i32_0 = arith.constant 0 : i32
    return %1, %c0_i32 : i32, i32
  }
  func.func @transform_3(%arg0: i32, %arg1: i32) -> (i32, i32) {
    %c0_i32 = arith.constant 0 : i32
    %c0_i32_0 = arith.constant 0 : i32
    return %arg0, %c0_i32 : i32, i32
  }
}

</mosaic_0001>

<llo_original>
// kernel: tpu_custom_call.1
$region0: #{tpu_custom_call.1}
  #allocation0 [shape = 'u32[]', space=smem, size = 0x4, offset = 0x4, fixed_abs, tag = 'smem constant byte address 0x4 - core index']
  #allocation1 [shape = 'u32[144,128]{1,0:T(1,128)}', space=vmem, size = 0x12000, scoped, tag = 'internal scratch']
  #allocation2 [shape = 'f32[32,1]{1,0:T(8,128)}', space=vmem, size = 0x4000, scoped, tag = 'scratch operand']
  %s0 = inlined_call_operand.hbm [shape: f32[64,256], index: 0, kind: input, shape index: {}]
  %s1 = inlined_call_operand.hbm [shape: f32[64,256], index: 1, kind: input, shape index: {}]
  %s2 = inlined_call_operand.vmem [shape: f32[64,1], index: 2, kind: input, shape index: {}]
  %s3 = inlined_call_operand.hbm [shape: f32[16,128], index: 3, kind: output, shape index: {}]
  %s4 = sld [smem:[#allocation0]]
  $region61: #{tpu_custom_call.1} parent=0
    _
  %s6 = ssub.s32 1, %s4
  %s7 = scalar_select 0, %s6, %s4
  $region1: #{tpu_custom_call.1} parent=0
    #allocation3 [shape = 'u8[65536]{0}', space=vmem, size = 0x10000, scoped, tag = 'input window, operand 0']
    #allocation4 [shape = 's32[2]{0}', space=sflag, size = 0x8, scoped, tag = 'scoped memory for tpu_custom_call.1']
    #allocation5 [shape = 's32[2]{0}', space=sflag, size = 0x8, scoped, tag = 'scoped memory for tpu_custom_call.1']
    #allocation6 [shape = 'u8[65536]{0}', space=vmem, size = 0x10000, scoped, tag = 'input window, operand 1']
    #allocation7 [shape = 's32[2]{0}', space=sflag, size = 0x8, scoped, tag = 'scoped memory for tpu_custom_call.1']
    #allocation8 [shape = 'u8[8192]{0}', space=vmem, size = 0x2000, scoped, tag = 'output window, operand 0']
    %8 = vsyncpa [#allocation4], 0
    %s9 = scalar_lea.sflag [#allocation4], 1
    %10 = vsyncpa %s9, 0
    %11 = vsyncpa [#allocation7], 0
    %s12 = scalar_lea.sflag [#allocation7], 1
    %13 = vsyncpa %s12, 0
    %14 = vsyncpa [#allocation5], 0
    %s15 = scalar_lea.sflag [#allocation5], 1
    %16 = vsyncpa %s15, 0
    loop: start=0, step=1, limit=4
    $region2: #{tpu_custom_call.1} parent=1 // loop_pre_header
      _
    $region3: #{tpu_custom_call.1} parent=1 // loop_header
      %s18 = sphi 0, %s22
      %p19 = scmp.ge.s32.totalorder %s18, 4
      %s25 = sphi 0, %s37
      %s26 = sphi 0, %s33
      %s27 = sphi 0, %s25
      %s28 = sphi 0, %s26
      %s29 = sphi 0, %s27
      %s30 = sphi 0, %s28
      %s42 = sphi 0, %s44
      %s45 = sphi 0, %s42
      %s46 = sphi 0, %s45
      %s62 = sphi 0, %s46
      %s70 = sphi 0, %s72
      %s73 = sphi 0, %s70
      %s74 = sphi 0, %s73
      %s90 = sphi 0, %s74
      %s98 = sphi 0, %s100
      %s101 = sphi 0, %s98
      %s102 = sphi 0, %s101
      %s118 = sphi 0, %s102
      %s124 = sphi 0, %s126
      %s127 = sphi 0, %s124
      %s128 = sphi 0, %s127
      %s144 = sphi 0, %s128
    $region4: #{tpu_custom_call.1} parent=1 // loop_header_branch
      %21 = sbr.rel (%p19) target = $region8
    $region5: #{tpu_custom_call.1} parent=1 // loop_body
      %s23 = ssub.s32 %s18, 1
      %s24 = ssub.s32 %s18, 2
      %s31 = sadd.s32 1, %s26
      %p32 = scmp.ge.s32.totalorder %s31, 1
      %s33 = scalar_select %p32, 0, %s31
      %s34 = sadd.s32 1, %s25
      %s35 = scalar_select %p32, %s34, %s25
      %p36 = scmp.ge.s32.totalorder %s35, 2
      %s37 = scalar_select %p36, 0, %s35
      %s38 = sadd.s32 %s25, %s26
      %s39 = sadd.s32 %s37, %s33
      %s40 = ssub.s32 %s38, %s39
      %p41 = scmp.eq.s32.totalorder %s40, 0
      %s43 = sadd.s32 %s42, 1
      %s44 = scalar_select %p41, %s42, %s43
      %p47 = pneg %p41
      %p48 = scmp.eq.s32.totalorder %s18, 1
      %p49 = por %p47, %p48
      %p50 = scmp.ne.s32.totalorder %s42, %s45
      %p51 = scmp.eq.s32.totalorder %s18, 0
      %p52 = por %p50, %p51
      %p53 = scmp.ne.s32.totalorder %s42, %s45
      %p54 = scmp.eq.s32.totalorder %s23, 1
      %p55 = por %p53, %p54
      %p56 = scmp.ne.s32.totalorder %s45, %s46
      %p57 = scmp.eq.s32.totalorder %s23, 0
      %p58 = por %p56, %p57
      %p59 = scmp.ne.s32.totalorder %s45, %s46
      %p60 = scmp.eq.s32.totalorder %s24, 1
      %p61 = por %p59, %p60
      %p63 = scmp.ne.s32.totalorder %s46, %s62
      %p64 = scmp.eq.s32.totalorder %s24, 0
      %p65 = por %p63, %p64
      %s66 = sadd.s32 %s25, %s26
      %s67 = sadd.s32 %s37, %s33
      %s68 = ssub.s32 %s66, %s67
      %p69 = scmp.eq.s32.totalorder %s68, 0
      %s71 = sadd.s32 %s70, 1
      %s72 = scalar_select %p69, %s70, %s71
      %p75 = pneg %p69
      %p76 = scmp.eq.s32.totalorder %s18, 1
      %p77 = por %p75, %p76
      %p78 = scmp.ne.s32.totalorder %s70, %s73
      %p79 = scmp.eq.s32.totalorder %s18, 0
      %p80 = por %p78, %p79
      %p81 = scmp.ne.s32.totalorder %s70, %s73
      %p82 = scmp.eq.s32.totalorder %s23, 1
      %p83 = por %p81, %p82
      %p84 = scmp.ne.s32.totalorder %s73, %s74
      %p85 = scmp.eq.s32.totalorder %s23, 0
      %p86 = por %p84, %p85
      %p87 = scmp.ne.s32.totalorder %s73, %s74
      %p88 = scmp.eq.s32.totalorder %s24, 1
      %p89 = por %p87, %p88
      %p91 = scmp.ne.s32.totalorder %s74, %s90
      %p92 = scmp.eq.s32.totalorder %s24, 0
      %p93 = por %p91, %p92
      %s94 = sadd.s32 %s25, %s26
      %s95 = sadd.s32 %s37, %s33
      %s96 = ssub.s32 %s94, %s95
      %p97 = scmp.eq.s32.totalorder %s96, 0
      %s99 = sadd.s32 %s98, 1
      %s100 = scalar_select %p97, %s98, %s99
      %p103 = pneg %p97
      %p104 = scmp.eq.s32.totalorder %s18, 1
      %p105 = por %p103, %p104
      %p106 = scmp.ne.s32.totalorder %s98, %s101
      %p107 = scmp.eq.s32.totalorder %s18, 0
      %p108 = por %p106, %p107
      %p109 = scmp.ne.s32.totalorder %s98, %s101
      %p110 = scmp.eq.s32.totalorder %s23, 1
      %p111 = por %p109, %p110
      %p112 = scmp.ne.s32.totalorder %s101, %s102
      %p113 = scmp.eq.s32.totalorder %s23, 0
      %p114 = por %p112, %p113
      %p115 = scmp.ne.s32.totalorder %s101, %s102
      %p116 = scmp.eq.s32.totalorder %s24, 1
      %p117 = por %p115, %p116
      %p119 = scmp.ne.s32.totalorder %s102, %s118
      %p120 = scmp.eq.s32.totalorder %s24, 0
      %p121 = por %p119, %p120
      %s122 = ssub.s32 %s25, %s37
      %p123 = scmp.eq.s32.totalorder %s122, 0
      %s125 = sadd.s32 %s124, 1
      %s126 = scalar_select %p123, %s124, %s125
      %p129 = pneg %p123
      %p130 = scmp.eq.s32.totalorder %s18, 1
      %p131 = por %p129, %p130
      %p132 = scmp.ne.s32.totalorder %s124, %s127
      %p133 = scmp.eq.s32.totalorder %s18, 0
      %p134 = por %p132, %p133
      %p135 = scmp.ne.s32.totalorder %s124, %s127
      %p136 = scmp.eq.s32.totalorder %s23, 1
      %p137 = por %p135, %p136
      %p138 = scmp.ne.s32.totalorder %s127, %s128
      %p139 = scmp.eq.s32.totalorder %s23, 0
      %p140 = por %p138, %p139
      %p141 = scmp.ne.s32.totalorder %s127, %s128
      %p142 = scmp.eq.s32.totalorder %s24, 1
      %p143 = por %p141, %p142
      %p145 = scmp.ne.s32.totalorder %s128, %s144
      %p146 = scmp.eq.s32.totalorder %s24, 0
      %p147 = por %p145, %p146
      %p148 = scmp.le.s32.totalorder 1, %s18
      %p149 = scmp.lt.s32.totalorder %s18, 3
      %p150 = pnand %p148, %p149
      %p151 = pneg %p150
      // Predicated region
      $region9: #{tpu_custom_call.1} parent=5 // pred_check
        _
      $region10: #{tpu_custom_call.1} parent=5 // pred_check_branch
        %153 = sbr.rel (%p150) target = $region12
      $region11: #{tpu_custom_call.1} parent=5 // pred_region
        %s154 = ssub.s32 %s18, 1
      $region12: #{tpu_custom_call.1} parent=5 // pred_fallthru
        _
      %p155 = scmp.lt.s32.totalorder %s18, 2
      // Predicated region
      $region13: #{tpu_custom_call.1} parent=5 // pred_check
        %p156 = pneg %p155
      $region14: #{tpu_custom_call.1} parent=5 // pred_check_branch
        %158 = sbr.rel (%p156) target = $region16
      $region15: #{tpu_custom_call.1} parent=5 // pred_region
        // Predicated region
        $region17: #{tpu_custom_call.1} parent=15 // pred_check
          %p159 = pneg %p52
        $region18: #{tpu_custom_call.1} parent=15 // pred_check_branch
          %161 = sbr.rel (%p159) target = $region20
        $region19: #{tpu_custom_call.1} parent=15 // pred_region
          %s162 = sand.u32 %s42, 1
          %s163 = scalar_lea.sflag [#allocation4], %s162
          %s164 = sand.u32 %s42, 1
          %s165 = smul.addr %s164, 64
          %s166 = scalar_lea.vmem [#allocation3], %s165
          %s167 = sadd.s32 %s25, %s26
          %s168 = smul.u32 4, %s167
          %s170 = ssub.s32 1024, 1024
          %171 = vsyncadd %s163, %s170
          %s172 = smul.addr %s168, 2
          %s173 = smul.addr %s172, 128
          %s174 = scalar_lea.hbm %s0, %s173
          %s175 = sshll.u32 %s166, 4
          %s176 = int_to_ptr.vmem [resolvable:$true] %s175
          %181 = dma.hbm_to_vmem [thread:$0]  %s174, 1024, %s176, %s163, 256, 256, 16
        $region20: #{tpu_custom_call.1} parent=15 // pred_fallthru
          _
        // Predicated region
        $region21: #{tpu_custom_call.1} parent=15 // pred_check
          %p182 = pneg %p80
        $region22: #{tpu_custom_call.1} parent=15 // pred_check_branch
          %184 = sbr.rel (%p182) target = $region24
        $region23: #{tpu_custom_call.1} parent=15 // pred_region
          %s185 = sand.u32 %s70, 1
          %s186 = scalar_lea.sflag [#allocation7], %s185
          %s187 = sand.u32 %s70, 1
          %s188 = smul.addr %s187, 64
          %s189 = scalar_lea.vmem [#allocation6], %s188
          %s190 = sadd.s32 %s25, %s26
          %s191 = smul.u32 4, %s190
          %s193 = ssub.s32 1024, 1024
          %194 = vsyncadd %s186, %s193
          %s195 = smul.addr %s191, 2
          %s196 = smul.addr %s195, 128
          %s197 = scalar_lea.hbm %s1, %s196
          %s198 = sshll.u32 %s189, 4
          %s199 = int_to_ptr.vmem [resolvable:$true] %s198
          %204 = dma.hbm_to_vmem [thread:$0]  %s197, 1024, %s199, %s186, 256, 256, 16
        $region24: #{tpu_custom_call.1} parent=15 // pred_fallthru
          _
        // Predicated region
        $region25: #{tpu_custom_call.1} parent=15 // pred_check
          %p205 = pneg %p108
        $region26: #{tpu_custom_call.1} parent=15 // pred_check_branch
          %207 = sbr.rel (%p205) target = $region28
        $region27: #{tpu_custom_call.1} parent=15 // pred_region
          %s208 = sadd.s32 %s25, %s26
          %s209 = smul.u32 4, %s208
          %p210 = scmp.lt.s32.totalorder %s209, 7
          %s211 = scalar_select %p210, %s209, 7
          %s212 = smul.addr %s211, 8
          %s213 = scalar_lea.vmem %s2, %s212
          %s214 = sadd.s32 %s25, %s26
          %s215 = smul.u32 4, %s214
        $region28: #{tpu_custom_call.1} parent=15 // pred_fallthru
          _
      $region16: #{tpu_custom_call.1} parent=5 // pred_fallthru
        _
      %p216 = scmp.le.s32.totalorder 1, %s18
      %p217 = scmp.lt.s32.totalorder %s18, 3
      %p218 = pnand %p216, %p217
      %p219 = pneg %p218
      // Predicated region
      $region29: #{tpu_custom_call.1} parent=5 // pred_check
        _
      $region30: #{tpu_custom_call.1} parent=5 // pred_check_branch
        %221 = sbr.rel (%p218) target = $region32
      $region31: #{tpu_custom_call.1} parent=5 // pred_region
        %s222 = ssub.s32 %s18, 1
        %s223 = sand.u32 %s45, 1
        %s224 = scalar_lea.sflag [#allocation4], %s223
        %s225 = sand.u32 %s45, 1
        %s226 = smul.addr %s225, 64
        %s227 = scalar_lea.vmem [#allocation3], %s226
        // Predicated region
        $region33: #{tpu_custom_call.1} parent=31 // pred_check
          %p228 = pneg %p58
        $region34: #{tpu_custom_call.1} parent=31 // pred_check_branch
          %230 = sbr.rel (%p228) target = $region36
        $region35: #{tpu_custom_call.1} parent=31 // pred_region
          %231 = dma.done %s224, 1024
        $region36: #{tpu_custom_call.1} parent=31 // pred_fallthru
          _
        %s232 = sand.u32 %s73, 1
        %s233 = scalar_lea.sflag [#allocation7], %s232
        %s234 = sand.u32 %s73, 1
        %s235 = smul.addr %s234, 64
        %s236 = scalar_lea.vmem [#allocation6], %s235
        // Predicated region
        $region37: #{tpu_custom_call.1} parent=31 // pred_check
          %p237 = pneg %p86
        $region38: #{tpu_custom_call.1} parent=31 // pred_check_branch
          %239 = sbr.rel (%p237) target = $region40
        $region39: #{tpu_custom_call.1} parent=31 // pred_region
          %240 = dma.done %s233, 1024
        $region40: #{tpu_custom_call.1} parent=31 // pred_fallthru
          _
        %s241 = sand.u32 %s45, 1
        %s242 = scalar_lea.sflag [#allocation4], %s241
        %s243 = sand.u32 %s45, 1
        %s244 = smul.addr %s243, 64
        %s245 = scalar_lea.vmem [#allocation3], %s244
        %p246 = pneg %p58
        %p247 = pneg %p55
        %s248 = sand.u32 %s73, 1
        %s249 = scalar_lea.sflag [#allocation7], %s248
        %s250 = sand.u32 %s73, 1
        %s251 = smul.addr %s250, 64
        %s252 = scalar_lea.vmem [#allocation6], %s251
        %p253 = pneg %p86
        %p254 = pneg %p83
        %s255 = sadd.s32 %s27, %s28
        %s256 = smul.u32 4, %s255
        %p257 = scmp.lt.s32.totalorder %s256, 7
        %s258 = scalar_select %p257, %s256, 7
        %s259 = smul.addr %s258, 8
        %s260 = scalar_lea.vmem %s2, %s259
        %p261 = pneg %p114
        %p262 = pneg %p111
        %p263 = pneg %p140
        %p264 = pneg %p137
        %s265 = sand.u32 %s127, 1
        %s266 = scalar_lea.sflag [#allocation5], %s265
        %s267 = sand.u32 %s127, 1
        %s268 = smul.addr %s267, 8
        %s269 = scalar_lea.vmem [#allocation8], %s268
        %s270 = sadd.s32 %s27, %s28
        %s271 = smul.u32 4, %s270
        %s272 = sadd.s32 %s27, %s28
        %s273 = smul.u32 4, %s272
        %s274 = sadd.s32 %s27, %s28
        %s275 = smul.u32 4, %s274
        %p276 = scmp.lt.s32.totalorder %s275, 7
        %s277 = scalar_select %p276, %s275, 7
        %s278 = smul.addr %s277, 8
        %s279 = scalar_lea.vmem %s2, %s278
        %s280 = sadd.s32 %s27, %s28
        %s281 = smul.u32 4, %s280
        %p282 = scmp.eq.s32.totalorder %s28, 0
        // Predicated region
        $region41: #{tpu_custom_call.1} parent=31 // pred_check
          %p283 = pneg %p282
        $region42: #{tpu_custom_call.1} parent=31 // pred_check_branch
          %285 = sbr.rel (%p283) target = $region44
        $region43: #{tpu_custom_call.1} parent=31 // pred_region
          %vm286 = vcmask 7168
          %287 = vst.msk [vmem:[#allocation2] sm:$0xff] %vm286, 0.0
          %288 = vst.msk [vmem:[#allocation2 + $0x8] sm:$0xff] %vm286, 0.0
          %289 = vst.msk [vmem:[#allocation2 + $0x10] sm:$0xff] %vm286, 0.0
          %290 = vst.msk [vmem:[#allocation2 + $0x18] sm:$0xff] %vm286, 0.0
        $region44: #{tpu_custom_call.1} parent=31 // pred_fallthru
          _
        %v291 = vld [vmem:[%s227] sm:$0xff]
        %v292 = vld [vmem:[%s227 + $0x8] sm:$0xff]
        %v293 = vld [vmem:[%s227 + $0x10] sm:$0xff]
        %v294 = vld [vmem:[%s227 + $0x18] sm:$0xff]
        %v295 = vld [vmem:[%s227 + $0x20] sm:$0xff]
        %v296 = vld [vmem:[%s227 + $0x28] sm:$0xff]
        %v297 = vld [vmem:[%s227 + $0x30] sm:$0xff]
        %v298 = vld [vmem:[%s227 + $0x38] sm:$0xff]
        %v299 = vld [vmem:[%s236] sm:$0xff]
        %v300 = vld [vmem:[%s236 + $0x8] sm:$0xff]
        %v301 = vld [vmem:[%s236 + $0x10] sm:$0xff]
        %v302 = vld [vmem:[%s236 + $0x18] sm:$0xff]
        %v303 = vld [vmem:[%s236 + $0x20] sm:$0xff]
        %v304 = vld [vmem:[%s236 + $0x28] sm:$0xff]
        %v305 = vld [vmem:[%s236 + $0x30] sm:$0xff]
        %v306 = vld [vmem:[%s236 + $0x38] sm:$0xff]
        %v307 = vmul.f32 %v291, %v299
        %v308 = vmul.f32 %v292, %v300
        %v309 = vmul.f32 %v293, %v301
        %v310 = vmul.f32 %v294, %v302
        %v311 = vmul.f32 %v295, %v303
        %v312 = vmul.f32 %v296, %v304
        %v313 = vmul.f32 %v297, %v305
        %v314 = vmul.f32 %v298, %v306
        %v315 = vadd.f32 %v307, %v308
        %316 = vadd.xlane.f32.xlu0 %v315
        %v317 = vpop.xlane.xlu0 %316
        %v318 = vadd.f32 %v309, %v310
        %319 = vadd.xlane.f32.xlu0 %v318
        %v320 = vpop.xlane.xlu0 %319
        %v321 = vadd.f32 %v311, %v312
        %322 = vadd.xlane.f32.xlu0 %v321
        %v323 = vpop.xlane.xlu0 %322
        %v324 = vadd.f32 %v313, %v314
        %325 = vadd.xlane.f32.xlu0 %v324
        %v326 = vpop.xlane.xlu0 %325
        %v327 = vmul.f32 %v291, %v291
        %v328 = vmul.f32 %v292, %v292
        %v329 = vmul.f32 %v293, %v293
        %v330 = vmul.f32 %v294, %v294
        %v331 = vmul.f32 %v295, %v295
        %v332 = vmul.f32 %v296, %v296
        %v333 = vmul.f32 %v297, %v297
        %v334 = vmul.f32 %v298, %v298
        %v335 = vadd.f32 %v327, %v328
        %336 = vadd.xlane.f32.xlu0 %v335
        %v337 = vpop.xlane.xlu0 %336
        %v338 = vadd.f32 %v329, %v330
        %339 = vadd.xlane.f32.xlu0 %v338
        %v340 = vpop.xlane.xlu0 %339
        %v341 = vadd.f32 %v331, %v332
        %342 = vadd.xlane.f32.xlu0 %v341
        %v343 = vpop.xlane.xlu0 %342
        %v344 = vadd.f32 %v333, %v334
        %345 = vadd.xlane.f32.xlu0 %v344
        %v346 = vpop.xlane.xlu0 %345
        %v347 = vmul.f32 %v299, %v299
        %v348 = vmul.f32 %v300, %v300
        %v349 = vmul.f32 %v301, %v301
        %v350 = vmul.f32 %v302, %v302
        %v351 = vmul.f32 %v303, %v303
        %v352 = vmul.f32 %v304, %v304
        %v353 = vmul.f32 %v305, %v305
        %v354 = vmul.f32 %v306, %v306
        %v355 = vadd.f32 %v347, %v348
        %356 = vadd.xlane.f32.xlu0 %v355
        %v357 = vpop.xlane.xlu0 %356
        %v358 = vadd.f32 %v349, %v350
        %359 = vadd.xlane.f32.xlu0 %v358
        %v360 = vpop.xlane.xlu0 %359
        %v361 = vadd.f32 %v351, %v352
        %362 = vadd.xlane.f32.xlu0 %v361
        %v363 = vpop.xlane.xlu0 %362
        %v364 = vadd.f32 %v353, %v354
        %365 = vadd.xlane.f32.xlu0 %v364
        %v366 = vpop.xlane.xlu0 %365
        %v367 = vmax.f32 %v337, 1e-16
        %v368 = vmax.f32 %v340, 1e-16
        %v369 = vmax.f32 %v343, 1e-16
        %v370 = vmax.f32 %v346, 1e-16
        %v371 = vrsqrt.pop %v367
        %v372 = vrsqrt.pop %v368
        %v373 = vrsqrt.pop %v369
        %v374 = vrsqrt.pop %v370
        %v375 = vmul.f32 %v317, %v371
        %v376 = vmul.f32 %v320, %v372
        %v377 = vmul.f32 %v323, %v373
        %v378 = vmul.f32 %v326, %v374
        %v379 = vmax.f32 %v357, 1e-16
        %v380 = vmax.f32 %v360, 1e-16
        %v381 = vmax.f32 %v363, 1e-16
        %v382 = vmax.f32 %v366, 1e-16
        %v383 = vrsqrt.pop %v379
        %v384 = vrsqrt.pop %v380
        %v385 = vrsqrt.pop %v381
        %v386 = vrsqrt.pop %v382
        %v387 = vmul.f32 %v375, %v383
        %v388 = vmul.f32 %v376, %v384
        %v389 = vmul.f32 %v377, %v385
        %v390 = vmul.f32 %v378, %v386
        %v391 = vsub.f32 1.0, %v387
        %v392 = vsub.f32 1.0, %v388
        %v393 = vsub.f32 1.0, %v389
        %v394 = vsub.f32 1.0, %v390
        %v395 = vmul.f32 %v391, %v391
        %v396 = vmul.f32 %v392, %v392
        %v397 = vmul.f32 %v393, %v393
        %v398 = vmul.f32 %v394, %v394
        %v399 = vld [vmem:[#allocation2] sm:$0xff]
        %v400 = vld [vmem:[#allocation2 + $0x8] sm:$0xff]
        %v401 = vld [vmem:[#allocation2 + $0x10] sm:$0xff]
        %v402 = vld [vmem:[#allocation2 + $0x18] sm:$0xff]
        %v403 = vld [vmem:[%s279] sm:$0xff]
        %v404 = vld [vmem:[%s279 + $0x8] sm:$0xff]
        %v405 = vld [vmem:[%s279 + $0x10] sm:$0xff]
        %v406 = vld [vmem:[%s279 + $0x18] sm:$0xff]
        %v407 = vmul.f32 %v395, %v403
        %v408 = vmul.f32 %v396, %v404
        %v409 = vmul.f32 %v397, %v405
        %v410 = vmul.f32 %v398, %v406
        %v411 = vadd.f32 %v399, %v407
        %v412 = vadd.f32 %v400, %v408
        %v413 = vadd.f32 %v401, %v409
        %v414 = vadd.f32 %v402, %v410
        %vm415 = vcmask 7168
        %416 = vst.msk [vmem:[#allocation2] sm:$0xff] %vm415, %v411
        %417 = vst.msk [vmem:[#allocation2 + $0x8] sm:$0xff] %vm415, %v412
        %418 = vst.msk [vmem:[#allocation2 + $0x10] sm:$0xff] %vm415, %v413
        %419 = vst.msk [vmem:[#allocation2 + $0x18] sm:$0xff] %vm415, %v414
        // Predicated region
        $region45: #{tpu_custom_call.1} parent=31 // pred_check
          %p420 = pneg %p282
        $region46: #{tpu_custom_call.1} parent=31 // pred_check_branch
          %422 = sbr.rel (%p420) target = $region48
        $region47: #{tpu_custom_call.1} parent=31 // pred_region
          %v423 = vld [vmem:[#allocation2] sm:$0xff]
          %v424 = vld [vmem:[#allocation2 + $0x8] sm:$0xff]
          %v425 = vld [vmem:[#allocation2 + $0x10] sm:$0xff]
          %v426 = vld [vmem:[#allocation2 + $0x18] sm:$0xff]
          %v427 = vsel %vm415, %v423, 0.0
          %v428 = vsel %vm415, %v424, 0.0
          %v429 = vadd.f32 %v427, %v428
          %v430 = vsel %vm415, %v425, 0.0
          %v431 = vadd.f32 %v429, %v430
          %v432 = vsel %vm415, %v426, 0.0
          %v433 = vadd.f32 %v431, %v432
          %434 = vadd.xlane.f32.xlu0 %v433
          %v435 = vpop.xlane.xlu0 %434
          %v436 = vrot.slane %v435, 4
          %v437 = vadd.f32 %v435, %v436
          %v438 = vrot.slane %v437, 2
          %v439 = vadd.f32 %v437, %v438
          %v440 = vrot.slane %v439, 1
          %v441 = vadd.f32 %v439, %v440
          %s442 = vtos %v441
          %v443 = vlaneseq
          %v444 = vshrl.u32 %v443, 7
          %v445 = vlaneseq
          %v446 = vand.u32 %v445, 127
          %vm447 = vcmp.eq.s32.totalorder %v444, 0
          %vm448 = vcmp.eq.s32.totalorder %v446, 0
          %vm449 = vmand %vm447, %vm448
          %v450 = vstv %s442
          %v451 = vsel %vm449, %v450, 0.0
          %452 = vst [vmem:[%s269] sm:$0xff] %v451
        $region48: #{tpu_custom_call.1} parent=31 // pred_fallthru
          _
        %s453 = sand.u32 %s127, 1
        %s454 = scalar_lea.sflag [#allocation5], %s453
        %s455 = sand.u32 %s127, 1
        %s456 = smul.addr %s455, 8
        %s457 = scalar_lea.vmem [#allocation8], %s456
        // Predicated region
        $region49: #{tpu_custom_call.1} parent=31 // pred_check
          %p458 = pneg %p137
        $region50: #{tpu_custom_call.1} parent=31 // pred_check_branch
          %460 = sbr.rel (%p458) target = $region52
        $region51: #{tpu_custom_call.1} parent=31 // pred_region
          %s462 = ssub.s32 128, 128
          %463 = vsyncadd %s454, %s462
          %s464 = smul.addr %s27, 128
          %s465 = scalar_lea.hbm %s3, %s464
          %s467 = sshll.u32 %s457, 4
          %s468 = int_to_ptr.vmem [resolvable:$true] %s467
          %470 = dma.vmem_to_hbm [thread:$0]  %s468, 128, %s465, %s454
        $region52: #{tpu_custom_call.1} parent=31 // pred_fallthru
          _
      $region32: #{tpu_custom_call.1} parent=5 // pred_fallthru
        _
      %p471 = scmp.le.s32.totalorder 2, %s18
      // Predicated region
      $region53: #{tpu_custom_call.1} parent=5 // pred_check
        %p472 = pneg %p471
      $region54: #{tpu_custom_call.1} parent=5 // pred_check_branch
        %474 = sbr.rel (%p472) target = $region56
      $region55: #{tpu_custom_call.1} parent=5 // pred_region
        %s475 = ssub.s32 %s18, 2
        // Predicated region
        $region57: #{tpu_custom_call.1} parent=55 // pred_check
          %p476 = pneg %p143
        $region58: #{tpu_custom_call.1} parent=55 // pred_check_branch
          %478 = sbr.rel (%p476) target = $region60
        $region59: #{tpu_custom_call.1} parent=55 // pred_region
          %s479 = sand.u32 %s128, 1
          %s480 = scalar_lea.sflag [#allocation5], %s479
          %s481 = sand.u32 %s128, 1
          %s482 = smul.addr %s481, 8
          %s483 = scalar_lea.vmem [#allocation8], %s482
          %484 = dma.done %s480, 128
        $region60: #{tpu_custom_call.1} parent=55 // pred_fallthru
          _
      $region56: #{tpu_custom_call.1} parent=5 // pred_fallthru
        _
    $region6: #{tpu_custom_call.1} parent=1 // loop_footer
      %s22 = sadd.s32 1, %s18
    $region7: #{tpu_custom_call.1} parent=1 // loop_footer_branch
      %17 = sbr.rel target = $region3
    $region8: #{tpu_custom_call.1} parent=1 // loop_exit
      _
    %485 = vsyncpa [#allocation4], 1
    %s486 = scalar_lea.sflag [#allocation4], 1
    %487 = vsyncpa %s486, 1
    %488 = vsyncpa [#allocation7], 1
    %s489 = scalar_lea.sflag [#allocation7], 1
    %490 = vsyncpa %s489, 1
    %491 = vsyncpa [#allocation5], 1
    %s492 = scalar_lea.sflag [#allocation5], 1
    %493 = vsyncpa %s492, 1

</llo_original>
